<compile_context>
chip_gen: v7x
topology: tpu7x:2x2x1
jax: 0.10.0
libtpu: 0.0.40
codegen_flags: <defaults>
</compile_context>

<pallas_src>
import math

import jax
import jax.numpy as jnp
from jax.experimental import pallas as pl
from jax.experimental.pallas import tpu as pltpu


def _identity_copy_kernel(x_ref, o_ref):
    # Whole-tile copy: the entire (trivial) forward semantics.
    o_ref[...] = x_ref[...]


# ~2 MiB blocks: big enough to amortize the ~0.35 us per-grid-step overhead and
# reach HBM roofline, small enough that double-buffered in+out stays far under
# the v7x 32 MiB scoped-VMEM default.
_MAX_BLOCK_BYTES = 2 * 1024 * 1024


def _lane_dense_view(shape):
    """Pick a (rows, lanes) factorization with lanes a multiple of 128, else None."""
    total = math.prod(shape) if len(shape) > 0 else 1
    for lanes in (1024, 512, 256, 128):
        if total > 0 and total % lanes == 0:
            return total // lanes, lanes
    return None


def identity_pallas(x: jax.Array) -> jax.Array:
    """Identity implemented as a Pallas TPU kernel (lane-dense, aliased)."""
    orig_shape = x.shape
    view = _lane_dense_view(orig_shape)

    if view is None:
        # Fallback for shapes whose element count is not a multiple of 128:
        # gridless whole-array block (block dims == full dims satisfies the
        # (8, 128) constraint regardless of trailing sizes).
        return pl.pallas_call(
            _identity_copy_kernel,
            out_shape=jax.ShapeDtypeStruct(x.shape, x.dtype),
            input_output_aliases={0: 0},
        )(x)

    rows, lanes = view
    x2 = x.reshape(rows, lanes)
    itemsize = jnp.dtype(x.dtype).itemsize
    rows_per_block = max(1, _MAX_BLOCK_BYTES // (lanes * itemsize))

    if rows_per_block >= rows:
        # Small tensor: single block covering the whole (rows, lanes) slab.
        row_tile = rows
        grid = (1,)
    else:
        # Large tensor: 8-aligned row tiles, 1-D "parallel" grid so the copy can
        # be sharded across v7x's two TensorCores.
        row_tile = max(8, (rows_per_block // 8) * 8)
        grid = (pl.cdiv(rows, row_tile),)

    spec = pl.BlockSpec((row_tile, lanes), lambda i: (i, 0))
    y2 = pl.pallas_call(
        _identity_copy_kernel,
        out_shape=jax.ShapeDtypeStruct((rows, lanes), x.dtype),
        grid=grid,
        in_specs=[spec],
        out_specs=spec,
        input_output_aliases={0: 0},
        compiler_params=pltpu.CompilerParams(
            dimension_semantics=("parallel",),
        ),
    )(x2)
    return y2.reshape(orig_shape)


class IdentityFirstStage:
    """Mirror of the PyTorch module. Pure identity -> return x directly (no copy)."""

    def __init__(self, *args, vq_interface: bool = False, **kwargs):
        self.vq_interface = vq_interface

    def encode(self, x, *args, **kwargs):
        return x

    def decode(self, x, *args, **kwargs):
        return x

    def quantize(self, x, *args, **kwargs):
        if self.vq_interface:
            return x, None, [None, None, None]
        return x

    def forward(self, x, *args, **kwargs):
        return x

    def __call__(self, x, *args, **kwargs):
        return self.forward(x, *args, **kwargs)


if __name__ == "__main__":
    key = jax.random.PRNGKey(0)
    # NCHW, small shapes consistent with an image-autoencoder first stage.
    x = jax.random.normal(key, (2, 4, 16, 16), dtype=jnp.float32)

    model = IdentityFirstStage(vq_interface=True)

    # Module forward / encode / decode / quantize are zero-cost identities.
    y = model(x)
    assert y is x
    q, _, extra = model.quantize(x)
    assert q is x and extra == [None, None, None]

    # Exercise the Pallas identity kernel once (lane-dense, input/output aliased).
    y_k = identity_pallas(x)
    y_k = jax.block_until_ready(y_k)
    assert y_k.shape == x.shape and y_k.dtype == x.dtype
    assert bool(jnp.all(y_k == x))

    print("KERNEL_OK")
</pallas_src>

<mosaic_0001>
module attributes {stable_mosaic.version = 11 : i64} {
  func.func @_identity_copy_kernel(%arg0: i32, %arg1: memref<2x1024xf32, #tpu.memory_space<vmem>>, %arg2: memref<2x1024xf32, #tpu.memory_space<vmem>>) attributes {dimension_semantics = [#tpu.dimension_semantics<parallel>], iteration_bounds = array<i64: 1>, scalar_prefetch = 0 : i64, scratch_operands = 0 : i64, tpu.core_type = #tpu.core_type<tc>, window_params = [{transform_indices = @transform_0, window_bounds = array<i64: 2, 1024>}, {transform_indices = @transform_1, window_bounds = array<i64: 2, 1024>}]} {
    %c0 = arith.constant 0 : index
    %c0_0 = arith.constant 0 : index
    %0 = vector.load %arg1[%c0, %c0_0] : memref<2x1024xf32, #tpu.memory_space<vmem>>, vector<2x1024xf32>
    %c0_1 = arith.constant 0 : index
    %c0_2 = arith.constant 0 : index
    %1 = vector.load %arg2[%c0_1, %c0_2] : memref<2x1024xf32, #tpu.memory_space<vmem>>, vector<2x1024xf32>
    tpu.vector_store %arg2[%c0_1, %c0_2], %0 {strides = array<i32>} : memref<2x1024xf32, #tpu.memory_space<vmem>>, vector<2x1024xf32>,
    return
  }
  func.func @transform_0(%arg0: i32) -> (i32, i32) {
    %c0_i32 = arith.constant 0 : i32
    %c0_i32_0 = arith.constant 0 : i32
    return %arg0, %c0_i32 : i32, i32
  }
  func.func @transform_1(%arg0: i32) -> (i32, i32) {
    %c0_i32 = arith.constant 0 : i32
    %c0_i32_0 = arith.constant 0 : i32
    return %arg0, %c0_i32 : i32, i32
  }
}

</mosaic_0001>

<llo_original>
// kernel: tpu_custom_call.1
$region0: #{tpu_custom_call.1}
  #allocation0 [shape = 'u32[]', space=smem, size = 0x4, offset = 0x4, fixed_abs, tag = 'smem constant byte address 0x4 - core index']
  #allocation1 [shape = 'u32[144,128]{1,0:T(1,128)}', space=vmem, size = 0x12000, scoped, tag = 'internal scratch']
  %s0 = inlined_call_operand.hbm [shape: f32[2,1024], index: 0, kind: input, shape index: {}, may-alias: {0,1}]
  %s1 = inlined_call_operand.hbm [shape: f32[2,1024], index: 1, kind: output, shape index: {}, may-alias: {0,1}]
  %s2 = sld [smem:[#allocation0]]
  $region18: #{tpu_custom_call.1} parent=0
    _
  %s4 = ssub.s32 1, %s2
  %s5 = scalar_select 0, %s4, %s2
  $region1: #{tpu_custom_call.1} parent=0
    #allocation2 [shape = 'u8[8192]{0}', space=vmem, size = 0x2000, scoped, tag = 'input window, operand 0, single buffered']
    #allocation3 [shape = 's32[1]{0}', space=sflag, size = 0x4, scoped, tag = 'scoped memory for tpu_custom_call.1']
    #allocation4 [shape = 's32[1]{0}', space=sflag, size = 0x4, scoped, tag = 'scoped memory for tpu_custom_call.1']
    #allocation5 [shape = 'u8[8192]{0}', space=vmem, size = 0x2000, scoped, tag = 'output window, operand 0, single buffered']
    %6 = vsyncpa [#allocation3], 0
    %7 = vsyncpa [#allocation4], 0
    // Predicated region
    $region2: #{tpu_custom_call.1} parent=1 // pred_check
      _
    $region3: #{tpu_custom_call.1} parent=1 // pred_check_branch
      %9 = sbr.rel (0) target = $region5
    $region4: #{tpu_custom_call.1} parent=1 // pred_region
      %s11 = ssub.s32 256, 256
      %12 = vsyncadd [#allocation3], %s11
      %s14 = sshll.u32 [#allocation2], 4
      %s15 = int_to_ptr.vmem [resolvable:$true] %s14
      %17 = dma.hbm_to_vmem [thread:$0]  %s0, 256, %s15, [#allocation3]
    $region5: #{tpu_custom_call.1} parent=1 // pred_fallthru
      _
    // Predicated region
    $region6: #{tpu_custom_call.1} parent=1 // pred_check
      _
    $region7: #{tpu_custom_call.1} parent=1 // pred_check_branch
      %19 = sbr.rel (0) target = $region9
    $region8: #{tpu_custom_call.1} parent=1 // pred_region
      %20 = dma.done [#allocation3], 256
    $region9: #{tpu_custom_call.1} parent=1 // pred_fallthru
      _
    %v21 = vld [vmem:[#allocation2] sm:$0xff]
    %v22 = vld [vmem:[#allocation2 + $0x8] sm:$0xff]
    %23 = vst [vmem:[#allocation5] sm:$0xff] %v21
    %24 = vst [vmem:[#allocation5 + $0x8] sm:$0xff] %v22
    // Predicated region
    $region10: #{tpu_custom_call.1} parent=1 // pred_check
      _
    $region11: #{tpu_custom_call.1} parent=1 // pred_check_branch
      %26 = sbr.rel (0) target = $region13
    $region12: #{tpu_custom_call.1} parent=1 // pred_region
      %s28 = ssub.s32 256, 256
      %29 = vsyncadd [#allocation4], %s28
      %s31 = sshll.u32 [#allocation5], 4
      %s32 = int_to_ptr.vmem [resolvable:$true] %s31
      %34 = dma.vmem_to_hbm [thread:$0]  %s32, 256, %s1, [#allocation4]
    $region13: #{tpu_custom_call.1} parent=1 // pred_fallthru
      _
    // Predicated region
    $region14: #{tpu_custom_call.1} parent=1 // pred_check
      _
    $region15: #{tpu_custom_call.1} parent=1 // pred_check_branch
      %36 = sbr.rel (0) target = $region17
    $region16: #{tpu_custom_call.1} parent=1 // pred_region
      %37 = dma.done [#allocation4], 256
    $region17: #{tpu_custom_call.1} parent=1 // pred_fallthru
      _
    %38 = vsyncpa [#allocation3], 1
    %39 = vsyncpa [#allocation4], 1

</llo_original>
